<compile_context>
chip_gen: v7x
topology: tpu7x:2x2x1
jax: 0.10.0
libtpu: 0.0.40
codegen_flags: <defaults>
</compile_context>

<pallas_src>
import jax
import jax.numpy as jnp
from jax.experimental import pallas as pl
from jax.experimental.pallas import tpu as pltpu

MAX_TB = 4096            # upper bound on the batch (lane) tile
MIN_TILES = 4            # keep >= ~4 grid steps: v7x megacore + v5e pipelining
PALLAS_MIN_BATCH = 2048  # below this, plain XLA is faster than a kernel launch
LANES = 128


def _pad8(n):
    return -(-n // 8) * 8


def _pick_tb(batch):
    """Largest lane-multiple tile <= MAX_TB that still leaves ~MIN_TILES steps."""
    tb = pl.cdiv(batch, MIN_TILES)
    tb = -(-tb // LANES) * LANES          # round up to a 128-lane multiple
    return int(max(LANES, min(MAX_TB, tb)))


def pack_params(params):
    """Pack all weights/biases into one [R, 128] f32 slab.

    Layer i occupies rows [roff_i, roff_i + out_i):
      cols [0, in_i)  -> W_i  (PyTorch [out, in] layout)
      col  127        -> b_i
    Row offsets are padded to sublane (8) multiples.
    """
    dims = []
    for i in range(1, 5):
        w = params[f"w{i}"]
        dims.append((w.shape[1], w.shape[0]))   # (in, out)
    roffs, off = [], 0
    for (_, fo) in dims:
        roffs.append(off)
        off += _pad8(fo)
    R = off
    slab = jnp.zeros((R, LANES), jnp.float32)
    for i, (fi, fo) in enumerate(dims, start=1):
        r = roffs[i - 1]
        slab = slab.at[r:r + fo, :fi].set(params[f"w{i}"])
        slab = slab.at[r:r + fo, LANES - 1:LANES].set(params[f"b{i}"])
    return slab, roffs, dims


def make_mlp_kernel(roffs, dims):
    """Kernel over one [4, TB] batch tile; params slab is VMEM-resident."""
    n_layers = len(dims)

    def mlp_kernel(x_ref, p_ref, o_ref):
        h = x_ref[...]                                   # [4, TB], batch on lanes
        for idx, (fi, fo) in enumerate(dims):
            r = roffs[idx]
            w = p_ref[r:r + fo, 0:fi]                    # static slice: [fo, fi]
            b = p_ref[r:r + fo, LANES - 1:LANES]         # static slice: [fo, 1]
            h = jnp.dot(w, h, preferred_element_type=jnp.float32) + b
            if idx < n_layers - 1:
                h = jnp.tanh(h)
        o_ref[...] = h.astype(o_ref.dtype)               # [1, TB], lane-dense

    return mlp_kernel


def net_forward_feature_major(x_fm, packed, roffs, dims):
    """x_fm: [4, B] float32 (feature-major, no wrapper transpose needed)."""
    feat, batch = x_fm.shape
    assert feat == 4, x_fm.shape

    tb = _pick_tb(batch)
    bp = pl.cdiv(batch, tb) * tb
    if bp != batch:                                      # pad only the last tile
        x_fm = jnp.pad(x_fm, ((0, 0), (0, bp - batch)))
    n_tiles = bp // tb
    R = packed.shape[0]

    out_t = pl.pallas_call(
        make_mlp_kernel(roffs, dims),
        out_shape=jax.ShapeDtypeStruct((1, bp), jnp.float32),
        grid=(n_tiles,),
        in_specs=[
            pl.BlockSpec((4, tb), lambda i: (0, i)),     # x: tiled along batch
            pl.BlockSpec((R, LANES), lambda i: (0, 0)),  # params: resident slab
        ],
        out_specs=pl.BlockSpec((1, tb), lambda i: (0, i)),
        compiler_params=pltpu.CompilerParams(
            dimension_semantics=("parallel",)),          # v7x: shard across 2 TCs
    )(x_fm, packed)

    return out_t[0, :batch].reshape(batch, 1)


def net_forward(x, params, *, force_pallas=False):
    """PyTorch-style entry: x [B, 4] float32 -> [B, 1]."""
    batch = x.shape[0]
    if batch < PALLAS_MIN_BATCH and not force_pallas:
        # Small-batch fallback: a kernel launch would be pure overhead here.
        return reference_forward(x, params)
    packed, roffs, dims = pack_params(params)
    # TODO(synk): for repeated calls, pack params once and feed x feature-major
    # upstream to avoid this transpose pass entirely.
    return net_forward_feature_major(x.T, packed, roffs, dims)


def init_params(key, l1, l2, l3):
    """Deterministic PyTorch-style init: weights [out, in], biases [out, 1]."""
    dims = [(4, l1), (l1, l2), (l2, l3), (l3, 1)]
    params = {}
    for i, (fan_in, fan_out) in enumerate(dims, start=1):
        key, kw, kb = jax.random.split(key, 3)
        bound = 1.0 / jnp.sqrt(jnp.float32(fan_in))
        params[f"w{i}"] = jax.random.uniform(
            kw, (fan_out, fan_in), jnp.float32, minval=-bound, maxval=bound)
        params[f"b{i}"] = jax.random.uniform(
            kb, (fan_out, 1), jnp.float32, minval=-bound, maxval=bound)
    return params


def reference_forward(x, params):
    """Pure-JAX reference of the same forward pass (standard [B, F] layout)."""
    h = jnp.tanh(x @ params["w1"].T + params["b1"].T)
    h = jnp.tanh(h @ params["w2"].T + params["b2"].T)
    h = jnp.tanh(h @ params["w3"].T + params["b3"].T)
    return h @ params["w4"].T + params["b4"].T


if __name__ == "__main__":
    l1, l2, l3 = 32, 32, 32

    key = jax.random.PRNGKey(0)
    key, kp = jax.random.split(key)
    params = init_params(kp, l1, l2, l3)
    packed, roffs, dims = pack_params(params)

    # --- Pallas path: fused candidate batch, produced directly in [4, B] ---
    key, kx = jax.random.split(key)
    batch = 512
    x_fm = jax.random.normal(kx, (4, batch), jnp.float32)
    out = net_forward_feature_major(x_fm, packed, roffs, dims)
    out = jax.block_until_ready(out)

    ref = reference_forward(x_fm.T, params)
    assert out.shape == (batch, 1), out.shape
    assert jnp.allclose(out, ref, atol=1e-5, rtol=1e-5), (out, ref)

    # --- Small-batch path: XLA fallback keeps semantics identical ---
    key, kx2 = jax.random.split(key)
    x_small = jax.random.normal(kx2, (8, 4), jnp.float32)
    out_small = jax.block_until_ready(net_forward(x_small, params))
    ref_small = reference_forward(x_small, params)
    assert out_small.shape == (8, 1), out_small.shape
    assert jnp.allclose(out_small, ref_small, atol=1e-5, rtol=1e-5)

    print("KERNEL_OK")
</pallas_src>

<mosaic_0001>
module attributes {stable_mosaic.version = 11 : i64} {
  func.func @mlp_kernel(%arg0: i32, %arg1: memref<4x128xf32, #tpu.memory_space<vmem>>, %arg2: memref<104x128xf32, #tpu.memory_space<vmem>>, %arg3: memref<1x128xf32, #tpu.memory_space<vmem>>) attributes {dimension_semantics = [#tpu.dimension_semantics<parallel>], iteration_bounds = array<i64: 4>, scalar_prefetch = 0 : i64, scratch_operands = 0 : i64, tpu.core_type = #tpu.core_type<tc>, window_params = [{transform_indices = @transform_0, window_bounds = array<i64: 4, 128>}, {pipeline_mode = #tpu.pipeline_mode<synchronous>, transform_indices = @transform_1, window_bounds = array<i64: 104, 128>}, {transform_indices = @transform_2, window_bounds = array<i64: 1, 128>}]} {
    %c0 = arith.constant 0 : index
    %c0_0 = arith.constant 0 : index
    %0 = vector.load %arg1[%c0, %c0_0] : memref<4x128xf32, #tpu.memory_space<vmem>>, vector<4x128xf32>
    %c0_1 = arith.constant 0 : index
    %c0_2 = arith.constant 0 : index
    %1 = vector.load %arg2[%c0_1, %c0_2] : memref<104x128xf32, #tpu.memory_space<vmem>>, vector<32x4xf32>
    %c0_3 = arith.constant 0 : index
    %c127 = arith.constant 127 : index
    %2 = vector.load %arg2[%c0_3, %c127] : memref<104x128xf32, #tpu.memory_space<vmem>>, vector<32x1xf32>
    %cst = arith.constant dense<0.000000e+00> : vector<32x128xf32>
    %3 = tpu.matmul %1, %0, %cst {dimension_numbers = #tpu.dot_dimension_numbers<[1], [0], [0], [1], [0, 0, 1, 1], [], []>} : vector<32x4xf32>, vector<4x128xf32>, vector<32x128xf32> -> vector<32x128xf32>
    %4 = vector.broadcast %2 : vector<32x1xf32> to vector<32x128xf32>
    %5 = arith.addf %3, %4 : vector<32x128xf32>
    %6 = math.tanh %5 : vector<32x128xf32>
    %c32 = arith.constant 32 : index
    %c0_4 = arith.constant 0 : index
    %7 = vector.load %arg2[%c32, %c0_4] : memref<104x128xf32, #tpu.memory_space<vmem>>, vector<32x32xf32>
    %c32_5 = arith.constant 32 : index
    %c127_6 = arith.constant 127 : index
    %8 = vector.load %arg2[%c32_5, %c127_6] : memref<104x128xf32, #tpu.memory_space<vmem>>, vector<32x1xf32>
    %cst_7 = arith.constant dense<0.000000e+00> : vector<32x128xf32>
    %9 = tpu.matmul %7, %6, %cst_7 {dimension_numbers = #tpu.dot_dimension_numbers<[1], [0], [0], [1], [0, 0, 1, 1], [], []>} : vector<32x32xf32>, vector<32x128xf32>, vector<32x128xf32> -> vector<32x128xf32>
    %10 = vector.broadcast %8 : vector<32x1xf32> to vector<32x128xf32>
    %11 = arith.addf %9, %10 : vector<32x128xf32>
    %12 = math.tanh %11 : vector<32x128xf32>
    %c64 = arith.constant 64 : index
    %c0_8 = arith.constant 0 : index
    %13 = vector.load %arg2[%c64, %c0_8] : memref<104x128xf32, #tpu.memory_space<vmem>>, vector<32x32xf32>
    %c64_9 = arith.constant 64 : index
    %c127_10 = arith.constant 127 : index
    %14 = vector.load %arg2[%c64_9, %c127_10] : memref<104x128xf32, #tpu.memory_space<vmem>>, vector<32x1xf32>
    %cst_11 = arith.constant dense<0.000000e+00> : vector<32x128xf32>
    %15 = tpu.matmul %13, %12, %cst_11 {dimension_numbers = #tpu.dot_dimension_numbers<[1], [0], [0], [1], [0, 0, 1, 1], [], []>} : vector<32x32xf32>, vector<32x128xf32>, vector<32x128xf32> -> vector<32x128xf32>
    %16 = vector.broadcast %14 : vector<32x1xf32> to vector<32x128xf32>
    %17 = arith.addf %15, %16 : vector<32x128xf32>
    %18 = math.tanh %17 : vector<32x128xf32>
    %c96 = arith.constant 96 : index
    %c0_12 = arith.constant 0 : index
    %19 = vector.load %arg2[%c96, %c0_12] : memref<104x128xf32, #tpu.memory_space<vmem>>, vector<1x32xf32>
    %c96_13 = arith.constant 96 : index
    %c127_14 = arith.constant 127 : index
    %20 = vector.load %arg2[%c96_13, %c127_14] : memref<104x128xf32, #tpu.memory_space<vmem>>, vector<1x1xf32>
    %cst_15 = arith.constant dense<0.000000e+00> : vector<1x128xf32>
    %21 = tpu.matmul %19, %18, %cst_15 {dimension_numbers = #tpu.dot_dimension_numbers<[1], [0], [0], [1], [0, 0, 1, 1], [], []>} : vector<1x32xf32>, vector<32x128xf32>, vector<1x128xf32> -> vector<1x128xf32>
    %22 = vector.broadcast %20 : vector<1x1xf32> to vector<1x128xf32>
    %23 = arith.addf %21, %22 : vector<1x128xf32>
    %c0_16 = arith.constant 0 : index
    %c0_17 = arith.constant 0 : index
    %24 = vector.load %arg3[%c0_16, %c0_17] : memref<1x128xf32, #tpu.memory_space<vmem>>, vector<1x128xf32>
    tpu.vector_store %arg3[%c0_16, %c0_17], %23 {strides = array<i32>} : memref<1x128xf32, #tpu.memory_space<vmem>>, vector<1x128xf32>,
    return
  }
  func.func @transform_0(%arg0: i32) -> (i32, i32) {
    %c0_i32 = arith.constant 0 : i32
    %c0_i32_0 = arith.constant 0 : i32
    return %c0_i32, %arg0 : i32, i32
  }
  func.func @transform_1(%arg0: i32) -> (i32, i32) {
    %c0_i32 = arith.constant 0 : i32
    %c0_i32_0 = arith.constant 0 : i32
    %c0_i32_1 = arith.constant 0 : i32
    return %c0_i32, %c0_i32_0 : i32, i32
  }
  func.func @transform_2(%arg0: i32) -> (i32, i32) {
    %c0_i32 = arith.constant 0 : i32
    %c0_i32_0 = arith.constant 0 : i32
    return %c0_i32, %arg0 : i32, i32
  }
}

</mosaic_0001>

<llo_original>
// kernel: tpu_custom_call.1
$region0: #{tpu_custom_call.1}
  #allocation0 [shape = 'u32[]', space=smem, size = 0x4, offset = 0x4, fixed_abs, tag = 'smem constant byte address 0x4 - core index']
  #allocation1 [shape = 'u32[144,128]{1,0:T(1,128)}', space=vmem, size = 0x12000, scoped, tag = 'internal scratch']
  %s0 = inlined_call_operand.hbm [shape: f32[4,512], index: 0, kind: input, shape index: {}]
  %s1 = inlined_call_operand.hbm [shape: f32[104,128], index: 1, kind: input, shape index: {}]
  %s2 = inlined_call_operand.hbm [shape: f32[1,512], index: 2, kind: output, shape index: {}]
  %s3 = sld [smem:[#allocation0]]
  $region49: #{tpu_custom_call.1} parent=0
    _
  %s5 = ssub.s32 1, %s3
  %s6 = scalar_select 0, %s5, %s3
  $region1: #{tpu_custom_call.1} parent=0
    #allocation2 [shape = 'u8[4096]{0}', space=vmem, size = 0x1000, scoped, tag = 'input window, operand 0']
    #allocation3 [shape = 's32[2]{0}', space=sflag, size = 0x8, scoped, tag = 'scoped memory for tpu_custom_call.1']
    #allocation4 [shape = 's32[2]{0}', space=sflag, size = 0x8, scoped, tag = 'scoped memory for tpu_custom_call.1']
    #allocation5 [shape = 'u8[53248]{0}', space=vmem, size = 0xd000, scoped, tag = 'input window, operand 1, single buffered']
    #allocation6 [shape = 's32[1]{0}', space=sflag, size = 0x4, scoped, tag = 'scoped memory for tpu_custom_call.1']
    #allocation7 [shape = 'u8[1024]{0}', space=vmem, size = 0x400, scoped, tag = 'output window, operand 0']
    %7 = vsyncpa [#allocation3], 0
    %s8 = scalar_lea.sflag [#allocation3], 1
    %9 = vsyncpa %s8, 0
    %10 = vsyncpa [#allocation6], 0
    %11 = vsyncpa [#allocation4], 0
    %s12 = scalar_lea.sflag [#allocation4], 1
    %13 = vsyncpa %s12, 0
    loop: start=0, step=1, limit=6
    $region2: #{tpu_custom_call.1} parent=1 // loop_pre_header
      _
    $region3: #{tpu_custom_call.1} parent=1 // loop_header
      %s15 = sphi 0, %s19
      %p16 = scmp.ge.s32.totalorder %s15, 6
      %s25 = sphi 0, %s27
      %s28 = sphi 0, %s25
      %s29 = sphi 0, %s28
      %s45 = sphi 0, %s29
      %s49 = sphi 0, %s49
      %s51 = sphi 0, %s49
      %s52 = sphi 0, %s51
      %s66 = sphi 0, %s52
      %s72 = sphi 0, %s74
      %s75 = sphi 0, %s72
      %s76 = sphi 0, %s75
      %s92 = sphi 0, %s76
    $region4: #{tpu_custom_call.1} parent=1 // loop_header_branch
      %18 = sbr.rel (%p16) target = $region8
    $region5: #{tpu_custom_call.1} parent=1 // loop_body
      %s20 = ssub.s32 %s15, 1
      %s21 = ssub.s32 %s15, 2
      %s22 = sadd.s32 %s15, 1
      %s23 = ssub.s32 %s15, %s22
      %p24 = scmp.eq.s32.totalorder %s23, 0
      %s26 = sadd.s32 %s25, 1
      %s27 = scalar_select %p24, %s25, %s26
      %p30 = pneg %p24
      %p31 = scmp.eq.s32.totalorder %s15, 3
      %p32 = por %p30, %p31
      %p33 = scmp.ne.s32.totalorder %s25, %s28
      %p34 = scmp.eq.s32.totalorder %s15, 0
      %p35 = por %p33, %p34
      %p36 = scmp.ne.s32.totalorder %s25, %s28
      %p37 = scmp.eq.s32.totalorder %s20, 3
      %p38 = por %p36, %p37
      %p39 = scmp.ne.s32.totalorder %s28, %s29
      %p40 = scmp.eq.s32.totalorder %s20, 0
      %p41 = por %p39, %p40
      %p42 = scmp.ne.s32.totalorder %s28, %s29
      %p43 = scmp.eq.s32.totalorder %s21, 3
      %p44 = por %p42, %p43
      %p46 = scmp.ne.s32.totalorder %s29, %s45
      %p47 = scmp.eq.s32.totalorder %s21, 0
      %p48 = por %p46, %p47
      %s50 = sadd.s32 %s49, 1
      %p53 = scmp.eq.s32.totalorder %s15, 3
      %p54 = scmp.ne.s32.totalorder %s49, %s51
      %p55 = scmp.eq.s32.totalorder %s15, 0
      %p56 = por %p54, %p55
      %p57 = scmp.ne.s32.totalorder %s49, %s51
      %p58 = scmp.eq.s32.totalorder %s20, 3
      %p59 = por %p57, %p58
      %p60 = scmp.ne.s32.totalorder %s51, %s52
      %p61 = scmp.eq.s32.totalorder %s20, 0
      %p62 = por %p60, %p61
      %p63 = scmp.ne.s32.totalorder %s51, %s52
      %p64 = scmp.eq.s32.totalorder %s21, 3
      %p65 = por %p63, %p64
      %p67 = scmp.ne.s32.totalorder %s52, %s66
      %p68 = scmp.eq.s32.totalorder %s21, 0
      %p69 = por %p67, %p68
      %s70 = ssub.s32 %s15, %s22
      %p71 = scmp.eq.s32.totalorder %s70, 0
      %s73 = sadd.s32 %s72, 1
      %s74 = scalar_select %p71, %s72, %s73
      %p77 = pneg %p71
      %p78 = scmp.eq.s32.totalorder %s15, 3
      %p79 = por %p77, %p78
      %p80 = scmp.ne.s32.totalorder %s72, %s75
      %p81 = scmp.eq.s32.totalorder %s15, 0
      %p82 = por %p80, %p81
      %p83 = scmp.ne.s32.totalorder %s72, %s75
      %p84 = scmp.eq.s32.totalorder %s20, 3
      %p85 = por %p83, %p84
      %p86 = scmp.ne.s32.totalorder %s75, %s76
      %p87 = scmp.eq.s32.totalorder %s20, 0
      %p88 = por %p86, %p87
      %p89 = scmp.ne.s32.totalorder %s75, %s76
      %p90 = scmp.eq.s32.totalorder %s21, 3
      %p91 = por %p89, %p90
      %p93 = scmp.ne.s32.totalorder %s76, %s92
      %p94 = scmp.eq.s32.totalorder %s21, 0
      %p95 = por %p93, %p94
      %p96 = scmp.le.s32.totalorder 1, %s15
      %p97 = scmp.lt.s32.totalorder %s15, 5
      %p98 = pnand %p96, %p97
      %p99 = pneg %p98
      // Predicated region
      $region9: #{tpu_custom_call.1} parent=5 // pred_check
        _
      $region10: #{tpu_custom_call.1} parent=5 // pred_check_branch
        %101 = sbr.rel (%p98) target = $region12
      $region11: #{tpu_custom_call.1} parent=5 // pred_region
        %s102 = ssub.s32 %s15, 1
        // Predicated region
        $region13: #{tpu_custom_call.1} parent=11 // pred_check
          %p103 = pneg %p62
        $region14: #{tpu_custom_call.1} parent=11 // pred_check_branch
          %105 = sbr.rel (%p103) target = $region16
        $region15: #{tpu_custom_call.1} parent=11 // pred_region
          %s107 = ssub.s32 1664, 1664
          %108 = vsyncadd [#allocation6], %s107
          %s109 = sshll.u32 [#allocation5], 4
          %s110 = int_to_ptr.vmem [resolvable:$true] %s109
          %115 = dma.hbm_to_vmem [thread:$0]  %s1, 1664, %s110, [#allocation6], 128, 128, 8
        $region16: #{tpu_custom_call.1} parent=11 // pred_fallthru
          _
      $region12: #{tpu_custom_call.1} parent=5 // pred_fallthru
        _
      %p116 = scmp.lt.s32.totalorder %s15, 4
      // Predicated region
      $region17: #{tpu_custom_call.1} parent=5 // pred_check
        %p117 = pneg %p116
      $region18: #{tpu_custom_call.1} parent=5 // pred_check_branch
        %119 = sbr.rel (%p117) target = $region20
      $region19: #{tpu_custom_call.1} parent=5 // pred_region
        // Predicated region
        $region21: #{tpu_custom_call.1} parent=19 // pred_check
          %p120 = pneg %p35
        $region22: #{tpu_custom_call.1} parent=19 // pred_check_branch
          %122 = sbr.rel (%p120) target = $region24
        $region23: #{tpu_custom_call.1} parent=19 // pred_region
          %s123 = sand.u32 %s25, 1
          %s124 = scalar_lea.sflag [#allocation3], %s123
          %s125 = sand.u32 %s25, 1
          %s126 = smul.addr %s125, 4
          %s127 = scalar_lea.vmem [#allocation2], %s126
          %s129 = ssub.s32 64, 64
          %130 = vsyncadd %s124, %s129
          %s131 = smul.addr %s15, 64
          %s132 = scalar_lea.hbm %s0, %s131
          %s134 = sshll.u32 %s127, 4
          %s135 = int_to_ptr.vmem [resolvable:$true] %s134
          %137 = dma.hbm_to_vmem [thread:$0]  %s132, 64, %s135, %s124
        $region24: #{tpu_custom_call.1} parent=19 // pred_fallthru
          _
      $region20: #{tpu_custom_call.1} parent=5 // pred_fallthru
        _
      %p138 = scmp.le.s32.totalorder 1, %s15
      %p139 = scmp.lt.s32.totalorder %s15, 5
      %p140 = pnand %p138, %p139
      %p141 = pneg %p140
      // Predicated region
      $region25: #{tpu_custom_call.1} parent=5 // pred_check
        _
      $region26: #{tpu_custom_call.1} parent=5 // pred_check_branch
        %143 = sbr.rel (%p140) target = $region28
      $region27: #{tpu_custom_call.1} parent=5 // pred_region
        %s144 = ssub.s32 %s15, 1
        %s145 = sand.u32 %s28, 1
        %s146 = scalar_lea.sflag [#allocation3], %s145
        %s147 = sand.u32 %s28, 1
        %s148 = smul.addr %s147, 4
        %s149 = scalar_lea.vmem [#allocation2], %s148
        // Predicated region
        $region29: #{tpu_custom_call.1} parent=27 // pred_check
          %p150 = pneg %p41
        $region30: #{tpu_custom_call.1} parent=27 // pred_check_branch
          %152 = sbr.rel (%p150) target = $region32
        $region31: #{tpu_custom_call.1} parent=27 // pred_region
          %153 = dma.done %s146, 64
        $region32: #{tpu_custom_call.1} parent=27 // pred_fallthru
          _
        // Predicated region
        $region33: #{tpu_custom_call.1} parent=27 // pred_check
          %p154 = pneg %p62
        $region34: #{tpu_custom_call.1} parent=27 // pred_check_branch
          %156 = sbr.rel (%p154) target = $region36
        $region35: #{tpu_custom_call.1} parent=27 // pred_region
          %157 = dma.done [#allocation6], 1664
        $region36: #{tpu_custom_call.1} parent=27 // pred_fallthru
          _
        %s158 = sand.u32 %s28, 1
        %s159 = scalar_lea.sflag [#allocation3], %s158
        %s160 = sand.u32 %s28, 1
        %s161 = smul.addr %s160, 4
        %s162 = scalar_lea.vmem [#allocation2], %s161
        %p163 = pneg %p41
        %p164 = pneg %p38
        %p165 = pneg %p62
        %p166 = pneg %p59
        %p167 = pneg %p88
        %p168 = pneg %p85
        %s169 = sand.u32 %s75, 1
        %s170 = scalar_lea.sflag [#allocation4], %s169
        %s171 = sand.u32 %s75, 1
        %s172 = scalar_lea.vmem [#allocation7], %s171
        %v173 = vld [vmem:[%s149] sm:$0xf]
        %v174 = vld [vmem:[#allocation5] sm:$0xff]
        %v175 = vld [vmem:[#allocation5 + $0x8] sm:$0xff]
        %v176 = vld [vmem:[#allocation5 + $0x10] sm:$0xff]
        %v177 = vld [vmem:[#allocation5 + $0x18] sm:$0xff]
        %179 = vset.pattern.permute.xlu0 127
        %180 = vperm.xlu0 %179, %v174
        %v181 = vpop.permute.xlu0 %180
        %184 = vset.pattern.permute.xlu0 127
        %185 = vperm.xlu0 %184, %v175
        %v186 = vpop.permute.xlu0 %185
        %189 = vset.pattern.permute.xlu0 127
        %190 = vperm.xlu0 %189, %v176
        %v191 = vpop.permute.xlu0 %190
        %194 = vset.pattern.permute.xlu0 127
        %195 = vperm.xlu0 %194, %v177
        %v196 = vpop.permute.xlu0 %195
        %vm198 = vcmask 31744
        %v199 = vsel %vm198, %v174, 0
        %v201 = vsel %vm198, %v175, 0
        %v203 = vsel %vm198, %v176, 0
        %v205 = vsel %vm198, %v177, 0
        %vm207 = vcmask 1043456
        %v209 = vsel %vm207, %v173, 0
        %211 = vmatprep.subr.mxu0 0.0
        %212 = vmatpush1.msra.mxu0 %v209
        %213 = vmatprep.subr.mxu0 0.0
        %214 = vmatpush1.msra.mxu0 0.0
        %215 = vmatprep.subr.mxu0 0.0
        %216 = vmatpush1.msra.mxu0 0.0
        %217 = vmatprep.subr.mxu0 0.0
        %218 = vmatpush1.msra.mxu0 0.0
        %219 = vmatprep.subr.mxu0 0.0
        %220 = vmatpush1.msra.mxu0 0.0
        %221 = vmatprep.subr.mxu0 0.0
        %222 = vmatpush1.msra.mxu0 0.0
        %223 = vmatprep.subr.mxu0 0.0
        %224 = vmatpush1.msra.mxu0 0.0
        %225 = vmatprep.subr.mxu0 0.0
        %226 = vmatpush1.msra.mxu0 0.0
        %227 = vmatprep.subr.mxu0 0.0
        %228 = vmatpush1.msra.mxu0 0.0
        %229 = vmatprep.subr.mxu0 0.0
        %230 = vmatpush1.msra.mxu0 0.0
        %231 = vmatprep.subr.mxu0 0.0
        %232 = vmatpush1.msra.mxu0 0.0
        %233 = vmatprep.subr.mxu0 0.0
        %234 = vmatpush1.msra.mxu0 0.0
        %235 = vmatprep.subr.mxu0 0.0
        %236 = vmatpush1.msra.mxu0 0.0
        %237 = vmatprep.subr.mxu0 0.0
        %238 = vmatpush1.msra.mxu0 0.0
        %239 = vmatprep.subr.mxu0 0.0
        %240 = vmatpush1.msra.mxu0 0.0
        %241 = vmatprep.subr.mxu0 0.0
        %242 = vmatpush1.msra.mxu0 0.0
        %243 = vmatprep.subr.mxu0 0.0
        %244 = vmatpush1.msra.mxu0 0.0
        %245 = vmatprep.subr.mxu0 0.0
        %246 = vmatpush1.msra.mxu0 0.0
        %247 = vmatprep.subr.mxu0 0.0
        %248 = vmatpush1.msra.mxu0 0.0
        %249 = vmatprep.subr.mxu0 0.0
        %250 = vmatpush1.msra.mxu0 0.0
        %251 = vmatprep.subr.mxu0 0.0
        %252 = vmatpush1.msra.mxu0 0.0
        %253 = vmatprep.subr.mxu0 0.0
        %254 = vmatpush1.msra.mxu0 0.0
        %255 = vmatprep.subr.mxu0 0.0
        %256 = vmatpush1.msra.mxu0 0.0
        %257 = vmatprep.subr.mxu0 0.0
        %258 = vmatpush1.msra.mxu0 0.0
        %259 = vmatprep.subr.mxu0 0.0
        %260 = vmatpush1.msra.mxu0 0.0
        %261 = vmatprep.subr.mxu0 0.0
        %262 = vmatpush1.msra.mxu0 0.0
        %263 = vmatprep.subr.mxu0 0.0
        %264 = vmatpush1.msra.mxu0 0.0
        %265 = vmatprep.subr.mxu0 0.0
        %266 = vmatpush1.msra.mxu0 0.0
        %267 = vmatprep.subr.mxu0 0.0
        %268 = vmatpush1.msra.mxu0 0.0
        %269 = vmatprep.subr.mxu0 0.0
        %270 = vmatpush1.msra.mxu0 0.0
        %271 = vmatprep.subr.mxu0 0.0
        %272 = vmatpush1.msra.mxu0 0.0
        %273 = vmatprep.subr.mxu0 0.0
        %274 = vmatpush1.msra.mxu0 0.0
        %275 = vmatprep.mubr.f32.mxu0 0.0
        %276 = vmatmul.mubr.f32.gmra.mrb[0].mxu0 %v199
        %v277 = vpop.f32.mrb[0].mxu0
        %v278 = vadd.f32 %v181, %v277
        %v279 = vpop.f32.mrb[0].mxu0
        %280 = vmatprep.mubr.f32.mxu0 0.0
        %281 = vmatmul.mubr.f32.gmra.mrb[0].mxu0 %v201
        %v282 = vpop.f32.mrb[0].mxu0
        %v283 = vadd.f32 %v186, %v282
        %v284 = vpop.f32.mrb[0].mxu0
        %285 = vmatprep.mubr.f32.mxu0 0.0
        %286 = vmatmul.mubr.f32.gmra.mrb[0].mxu0 %v203
        %v287 = vpop.f32.mrb[0].mxu0
        %v288 = vadd.f32 %v191, %v287
        %v289 = vpop.f32.mrb[0].mxu0
        %290 = vmatprep.mubr.f32.mxu0 0.0
        %291 = vmatmul.mubr.f32.gmra.mrb[0].mxu0 %v205
        %v292 = vpop.f32.mrb[0].mxu0
        %v293 = vadd.f32 %v196, %v292
        %v294 = vpop.f32.mrb[0].mxu0
        %295 = vdwg.mxu0
        %v296 = vtanh.pop %v278
        %v297 = vtanh.pop %v283
        %v298 = vtanh.pop %v288
        %v299 = vtanh.pop %v293
        %v300 = vld [vmem:[#allocation5 + $0x20] sm:$0xff]
        %v301 = vld [vmem:[#allocation5 + $0x28] sm:$0xff]
        %v302 = vld [vmem:[#allocation5 + $0x30] sm:$0xff]
        %v303 = vld [vmem:[#allocation5 + $0x38] sm:$0xff]
        %305 = vset.pattern.permute.xlu0 127
        %306 = vperm.xlu0 %305, %v300
        %v307 = vpop.permute.xlu0 %306
        %310 = vset.pattern.permute.xlu0 127
        %311 = vperm.xlu0 %310, %v301
        %v312 = vpop.permute.xlu0 %311
        %315 = vset.pattern.permute.xlu0 127
        %316 = vperm.xlu0 %315, %v302
        %v317 = vpop.permute.xlu0 %316
        %320 = vset.pattern.permute.xlu0 127
        %321 = vperm.xlu0 %320, %v303
        %v322 = vpop.permute.xlu0 %321
        %vm324 = vcmask 261120
        %v325 = vsel %vm324, %v300, 0
        %v327 = vsel %vm324, %v301, 0
        %v329 = vsel %vm324, %v302, 0
        %v331 = vsel %vm324, %v303, 0
        %333 = vmatprep.subr.mxu0 0.0
        %334 = vmatpush1.msra.mxu0 %v296
        %335 = vmatprep.subr.mxu0 0.0
        %336 = vmatpush1.msra.mxu0 %v297
        %337 = vmatprep.subr.mxu0 0.0
        %338 = vmatpush1.msra.mxu0 %v298
        %339 = vmatprep.subr.mxu0 0.0
        %340 = vmatpush1.msra.mxu0 %v299
        %341 = vmatprep.subr.mxu0 0.0
        %342 = vmatpush1.msra.mxu0 0.0
        %343 = vmatprep.subr.mxu0 0.0
        %344 = vmatpush1.msra.mxu0 0.0
        %345 = vmatprep.subr.mxu0 0.0
        %346 = vmatpush1.msra.mxu0 0.0
        %347 = vmatprep.subr.mxu0 0.0
        %348 = vmatpush1.msra.mxu0 0.0
        %349 = vmatprep.subr.mxu0 0.0
        %350 = vmatpush1.msra.mxu0 0.0
        %351 = vmatprep.subr.mxu0 0.0
        %352 = vmatpush1.msra.mxu0 0.0
        %353 = vmatprep.subr.mxu0 0.0
        %354 = vmatpush1.msra.mxu0 0.0
        %355 = vmatprep.subr.mxu0 0.0
        %356 = vmatpush1.msra.mxu0 0.0
        %357 = vmatprep.subr.mxu0 0.0
        %358 = vmatpush1.msra.mxu0 0.0
        %359 = vmatprep.subr.mxu0 0.0
        %360 = vmatpush1.msra.mxu0 0.0
        %361 = vmatprep.subr.mxu0 0.0
        %362 = vmatpush1.msra.mxu0 0.0
        %363 = vmatprep.subr.mxu0 0.0
        %364 = vmatpush1.msra.mxu0 0.0
        %365 = vmatprep.subr.mxu0 0.0
        %366 = vmatpush1.msra.mxu0 0.0
        %367 = vmatprep.subr.mxu0 0.0
        %368 = vmatpush1.msra.mxu0 0.0
        %369 = vmatprep.subr.mxu0 0.0
        %370 = vmatpush1.msra.mxu0 0.0
        %371 = vmatprep.subr.mxu0 0.0
        %372 = vmatpush1.msra.mxu0 0.0
        %373 = vmatprep.subr.mxu0 0.0
        %374 = vmatpush1.msra.mxu0 0.0
        %375 = vmatprep.subr.mxu0 0.0
        %376 = vmatpush1.msra.mxu0 0.0
        %377 = vmatprep.subr.mxu0 0.0
        %378 = vmatpush1.msra.mxu0 0.0
        %379 = vmatprep.subr.mxu0 0.0
        %380 = vmatpush1.msra.mxu0 0.0
        %381 = vmatprep.subr.mxu0 0.0
        %382 = vmatpush1.msra.mxu0 0.0
        %383 = vmatprep.subr.mxu0 0.0
        %384 = vmatpush1.msra.mxu0 0.0
        %385 = vmatprep.subr.mxu0 0.0
        %386 = vmatpush1.msra.mxu0 0.0
        %387 = vmatprep.subr.mxu0 0.0
        %388 = vmatpush1.msra.mxu0 0.0
        %389 = vmatprep.subr.mxu0 0.0
        %390 = vmatpush1.msra.mxu0 0.0
        %391 = vmatprep.subr.mxu0 0.0
        %392 = vmatpush1.msra.mxu0 0.0
        %393 = vmatprep.subr.mxu0 0.0
        %394 = vmatpush1.msra.mxu0 0.0
        %395 = vmatprep.subr.mxu0 0.0
        %396 = vmatpush1.msra.mxu0 0.0
        %397 = vmatprep.mubr.f32.mxu0 0.0
        %398 = vmatmul.mubr.f32.gmra.mrb[0].mxu0 %v325
        %v399 = vpop.f32.mrb[0].mxu0
        %v400 = vadd.f32 %v307, %v399
        %v401 = vpop.f32.mrb[0].mxu0
        %402 = vmatprep.mubr.f32.mxu0 0.0
        %403 = vmatmul.mubr.f32.gmra.mrb[0].mxu0 %v327
        %v404 = vpop.f32.mrb[0].mxu0
        %v405 = vadd.f32 %v312, %v404
        %v406 = vpop.f32.mrb[0].mxu0
        %407 = vmatprep.mubr.f32.mxu0 0.0
        %408 = vmatmul.mubr.f32.gmra.mrb[0].mxu0 %v329
        %v409 = vpop.f32.mrb[0].mxu0
        %v410 = vadd.f32 %v317, %v409
        %v411 = vpop.f32.mrb[0].mxu0
        %412 = vmatprep.mubr.f32.mxu0 0.0
        %413 = vmatmul.mubr.f32.gmra.mrb[0].mxu0 %v331
        %v414 = vpop.f32.mrb[0].mxu0
        %v415 = vadd.f32 %v322, %v414
        %v416 = vpop.f32.mrb[0].mxu0
        %417 = vdwg.mxu0
        %v418 = vtanh.pop %v400
        %v419 = vtanh.pop %v405
        %v420 = vtanh.pop %v410
        %v421 = vtanh.pop %v415
        %v422 = vld [vmem:[#allocation5 + $0x40] sm:$0xff]
        %v423 = vld [vmem:[#allocation5 + $0x48] sm:$0xff]
        %v424 = vld [vmem:[#allocation5 + $0x50] sm:$0xff]
        %v425 = vld [vmem:[#allocation5 + $0x58] sm:$0xff]
        %427 = vset.pattern.permute.xlu0 127
        %428 = vperm.xlu0 %427, %v422
        %v429 = vpop.permute.xlu0 %428
        %432 = vset.pattern.permute.xlu0 127
        %433 = vperm.xlu0 %432, %v423
        %v434 = vpop.permute.xlu0 %433
        %437 = vset.pattern.permute.xlu0 127
        %438 = vperm.xlu0 %437, %v424
        %v439 = vpop.permute.xlu0 %438
        %442 = vset.pattern.permute.xlu0 127
        %443 = vperm.xlu0 %442, %v425
        %v444 = vpop.permute.xlu0 %443
        %v446 = vsel %vm324, %v422, 0
        %v448 = vsel %vm324, %v423, 0
        %v450 = vsel %vm324, %v424, 0
        %v452 = vsel %vm324, %v425, 0
        %454 = vmatprep.subr.mxu0 0.0
        %455 = vmatpush1.msra.mxu0 %v418
        %456 = vmatprep.subr.mxu0 0.0
        %457 = vmatpush1.msra.mxu0 %v419
        %458 = vmatprep.subr.mxu0 0.0
        %459 = vmatpush1.msra.mxu0 %v420
        %460 = vmatprep.subr.mxu0 0.0
        %461 = vmatpush1.msra.mxu0 %v421
        %462 = vmatprep.subr.mxu0 0.0
        %463 = vmatpush1.msra.mxu0 0.0
        %464 = vmatprep.subr.mxu0 0.0
        %465 = vmatpush1.msra.mxu0 0.0
        %466 = vmatprep.subr.mxu0 0.0
        %467 = vmatpush1.msra.mxu0 0.0
        %468 = vmatprep.subr.mxu0 0.0
        %469 = vmatpush1.msra.mxu0 0.0
        %470 = vmatprep.subr.mxu0 0.0
        %471 = vmatpush1.msra.mxu0 0.0
        %472 = vmatprep.subr.mxu0 0.0
        %473 = vmatpush1.msra.mxu0 0.0
        %474 = vmatprep.subr.mxu0 0.0
        %475 = vmatpush1.msra.mxu0 0.0
        %476 = vmatprep.subr.mxu0 0.0
        %477 = vmatpush1.msra.mxu0 0.0
        %478 = vmatprep.subr.mxu0 0.0
        %479 = vmatpush1.msra.mxu0 0.0
        %480 = vmatprep.subr.mxu0 0.0
        %481 = vmatpush1.msra.mxu0 0.0
        %482 = vmatprep.subr.mxu0 0.0
        %483 = vmatpush1.msra.mxu0 0.0
        %484 = vmatprep.subr.mxu0 0.0
        %485 = vmatpush1.msra.mxu0 0.0
        %486 = vmatprep.subr.mxu0 0.0
        %487 = vmatpush1.msra.mxu0 0.0
        %488 = vmatprep.subr.mxu0 0.0
        %489 = vmatpush1.msra.mxu0 0.0
        %490 = vmatprep.subr.mxu0 0.0
        %491 = vmatpush1.msra.mxu0 0.0
        %492 = vmatprep.subr.mxu0 0.0
        %493 = vmatpush1.msra.mxu0 0.0
        %494 = vmatprep.subr.mxu0 0.0
        %495 = vmatpush1.msra.mxu0 0.0
        %496 = vmatprep.subr.mxu0 0.0
        %497 = vmatpush1.msra.mxu0 0.0
        %498 = vmatprep.subr.mxu0 0.0
        %499 = vmatpush1.msra.mxu0 0.0
        %500 = vmatprep.subr.mxu0 0.0
        %501 = vmatpush1.msra.mxu0 0.0
        %502 = vmatprep.subr.mxu0 0.0
        %503 = vmatpush1.msra.mxu0 0.0
        %504 = vmatprep.subr.mxu0 0.0
        %505 = vmatpush1.msra.mxu0 0.0
        %506 = vmatprep.subr.mxu0 0.0
        %507 = vmatpush1.msra.mxu0 0.0
        %508 = vmatprep.subr.mxu0 0.0
        %509 = vmatpush1.msra.mxu0 0.0
        %510 = vmatprep.subr.mxu0 0.0
        %511 = vmatpush1.msra.mxu0 0.0
        %512 = vmatprep.subr.mxu0 0.0
        %513 = vmatpush1.msra.mxu0 0.0
        %514 = vmatprep.subr.mxu0 0.0
        %515 = vmatpush1.msra.mxu0 0.0
        %516 = vmatprep.subr.mxu0 0.0
        %517 = vmatpush1.msra.mxu0 0.0
        %518 = vmatprep.mubr.f32.mxu0 0.0
        %519 = vmatmul.mubr.f32.gmra.mrb[0].mxu0 %v446
        %v520 = vpop.f32.mrb[0].mxu0
        %v521 = vadd.f32 %v429, %v520
        %v522 = vpop.f32.mrb[0].mxu0
        %523 = vmatprep.mubr.f32.mxu0 0.0
        %524 = vmatmul.mubr.f32.gmra.mrb[0].mxu0 %v448
        %v525 = vpop.f32.mrb[0].mxu0
        %v526 = vadd.f32 %v434, %v525
        %v527 = vpop.f32.mrb[0].mxu0
        %528 = vmatprep.mubr.f32.mxu0 0.0
        %529 = vmatmul.mubr.f32.gmra.mrb[0].mxu0 %v450
        %v530 = vpop.f32.mrb[0].mxu0
        %v531 = vadd.f32 %v439, %v530
        %v532 = vpop.f32.mrb[0].mxu0
        %533 = vmatprep.mubr.f32.mxu0 0.0
        %534 = vmatmul.mubr.f32.gmra.mrb[0].mxu0 %v452
        %v535 = vpop.f32.mrb[0].mxu0
        %v536 = vadd.f32 %v444, %v535
        %v537 = vpop.f32.mrb[0].mxu0
        %538 = vdwg.mxu0
        %v539 = vtanh.pop %v521
        %v540 = vtanh.pop %v526
        %v541 = vtanh.pop %v531
        %v542 = vtanh.pop %v536
        %v543 = vld [vmem:[#allocation5 + $0x60] sm:$0x1]
        %545 = vset.pattern.permute.xlu0 127
        %546 = vperm.xlu0 %545, %v543
        %v547 = vpop.permute.xlu0 %546
        %v549 = vsel %vm324, %v543, 0
        %551 = vmatprep.subr.mxu0 0.0
        %552 = vmatpush1.msra.mxu0 %v539
        %553 = vmatprep.subr.mxu0 0.0
        %554 = vmatpush1.msra.mxu0 %v540
        %555 = vmatprep.subr.mxu0 0.0
        %556 = vmatpush1.msra.mxu0 %v541
        %557 = vmatprep.subr.mxu0 0.0
        %558 = vmatpush1.msra.mxu0 %v542
        %559 = vmatprep.subr.mxu0 0.0
        %560 = vmatpush1.msra.mxu0 0.0
        %561 = vmatprep.subr.mxu0 0.0
        %562 = vmatpush1.msra.mxu0 0.0
        %563 = vmatprep.subr.mxu0 0.0
        %564 = vmatpush1.msra.mxu0 0.0
        %565 = vmatprep.subr.mxu0 0.0
        %566 = vmatpush1.msra.mxu0 0.0
        %567 = vmatprep.subr.mxu0 0.0
        %568 = vmatpush1.msra.mxu0 0.0
        %569 = vmatprep.subr.mxu0 0.0
        %570 = vmatpush1.msra.mxu0 0.0
        %571 = vmatprep.subr.mxu0 0.0
        %572 = vmatpush1.msra.mxu0 0.0
        %573 = vmatprep.subr.mxu0 0.0
        %574 = vmatpush1.msra.mxu0 0.0
        %575 = vmatprep.subr.mxu0 0.0
        %576 = vmatpush1.msra.mxu0 0.0
        %577 = vmatprep.subr.mxu0 0.0
        %578 = vmatpush1.msra.mxu0 0.0
        %579 = vmatprep.subr.mxu0 0.0
        %580 = vmatpush1.msra.mxu0 0.0
        %581 = vmatprep.subr.mxu0 0.0
        %582 = vmatpush1.msra.mxu0 0.0
        %583 = vmatprep.subr.mxu0 0.0
        %584 = vmatpush1.msra.mxu0 0.0
        %585 = vmatprep.subr.mxu0 0.0
        %586 = vmatpush1.msra.mxu0 0.0
        %587 = vmatprep.subr.mxu0 0.0
        %588 = vmatpush1.msra.mxu0 0.0
        %589 = vmatprep.subr.mxu0 0.0
        %590 = vmatpush1.msra.mxu0 0.0
        %591 = vmatprep.subr.mxu0 0.0
        %592 = vmatpush1.msra.mxu0 0.0
        %593 = vmatprep.subr.mxu0 0.0
        %594 = vmatpush1.msra.mxu0 0.0
        %595 = vmatprep.subr.mxu0 0.0
        %596 = vmatpush1.msra.mxu0 0.0
        %597 = vmatprep.subr.mxu0 0.0
        %598 = vmatpush1.msra.mxu0 0.0
        %599 = vmatprep.subr.mxu0 0.0
        %600 = vmatpush1.msra.mxu0 0.0
        %601 = vmatprep.subr.mxu0 0.0
        %602 = vmatpush1.msra.mxu0 0.0
        %603 = vmatprep.subr.mxu0 0.0
        %604 = vmatpush1.msra.mxu0 0.0
        %605 = vmatprep.subr.mxu0 0.0
        %606 = vmatpush1.msra.mxu0 0.0
        %607 = vmatprep.subr.mxu0 0.0
        %608 = vmatpush1.msra.mxu0 0.0
        %609 = vmatprep.subr.mxu0 0.0
        %610 = vmatpush1.msra.mxu0 0.0
        %611 = vmatprep.subr.mxu0 0.0
        %612 = vmatpush1.msra.mxu0 0.0
        %613 = vmatprep.subr.mxu0 0.0
        %614 = vmatpush1.msra.mxu0 0.0
        %615 = vmatprep.mubr.f32.mxu0 0.0
        %616 = vmatmul.mubr.f32.gmra.mrb[0].mxu0 %v549
        %v617 = vpop.f32.mrb[0].mxu0
        %v618 = vadd.f32 %v547, %v617
        %v619 = vpop.f32.mrb[0].mxu0
        %620 = vdwg.mxu0
        %621 = vst [vmem:[%s172] sm:$0x1] %v618
        %s622 = sand.u32 %s75, 1
        %s623 = scalar_lea.sflag [#allocation4], %s622
        %s624 = sand.u32 %s75, 1
        %s625 = scalar_lea.vmem [#allocation7], %s624
        // Predicated region
        $region37: #{tpu_custom_call.1} parent=27 // pred_check
          %p626 = pneg %p85
        $region38: #{tpu_custom_call.1} parent=27 // pred_check_branch
          %628 = sbr.rel (%p626) target = $region40
        $region39: #{tpu_custom_call.1} parent=27 // pred_region
          %s630 = ssub.s32 16, 16
          %631 = vsyncadd %s623, %s630
          %s632 = smul.addr %s20, 16
          %s633 = scalar_lea.hbm %s2, %s632
          %s635 = sshll.u32 %s625, 4
          %s636 = int_to_ptr.vmem [resolvable:$true] %s635
          %638 = dma.vmem_to_hbm [thread:$0]  %s636, 16, %s633, %s623
        $region40: #{tpu_custom_call.1} parent=27 // pred_fallthru
          _
      $region28: #{tpu_custom_call.1} parent=5 // pred_fallthru
        _
      %p639 = scmp.le.s32.totalorder 2, %s15
      // Predicated region
      $region41: #{tpu_custom_call.1} parent=5 // pred_check
        %p640 = pneg %p639
      $region42: #{tpu_custom_call.1} parent=5 // pred_check_branch
        %642 = sbr.rel (%p640) target = $region44
      $region43: #{tpu_custom_call.1} parent=5 // pred_region
        %s643 = ssub.s32 %s15, 2
        // Predicated region
        $region45: #{tpu_custom_call.1} parent=43 // pred_check
          %p644 = pneg %p91
        $region46: #{tpu_custom_call.1} parent=43 // pred_check_branch
          %646 = sbr.rel (%p644) target = $region48
        $region47: #{tpu_custom_call.1} parent=43 // pred_region
          %s647 = sand.u32 %s76, 1
          %s648 = scalar_lea.sflag [#allocation4], %s647
          %s649 = sand.u32 %s76, 1
          %s650 = scalar_lea.vmem [#allocation7], %s649
          %651 = dma.done %s648, 16
        $region48: #{tpu_custom_call.1} parent=43 // pred_fallthru
          _
      $region44: #{tpu_custom_call.1} parent=5 // pred_fallthru
        _
    $region6: #{tpu_custom_call.1} parent=1 // loop_footer
      %s19 = sadd.s32 1, %s15
    $region7: #{tpu_custom_call.1} parent=1 // loop_footer_branch
      %14 = sbr.rel target = $region3
    $region8: #{tpu_custom_call.1} parent=1 // loop_exit
      _
    %652 = vsyncpa [#allocation3], 1
    %s653 = scalar_lea.sflag [#allocation3], 1
    %654 = vsyncpa %s653, 1
    %655 = vsyncpa [#allocation6], 1
    %656 = vsyncpa [#allocation4], 1
    %s657 = scalar_lea.sflag [#allocation4], 1
    %658 = vsyncpa %s657, 1

</llo_original>
